<compile_context>
chip_gen: v5e
topology: v5e:2x2
jax: 0.10.0
libtpu: 0.0.40
codegen_flags: <defaults>
</compile_context>

<pallas_src>
import functools

import jax
import jax.numpy as jnp
from jax import lax
from jax.experimental import pallas as pl
from jax.experimental.pallas import tpu as pltpu


def _dsconv_kernel(x_ref, dw_ref, pw_ref, b_ref, o_ref, xpf_ref, acc_ref, *,
                   stride, padding, dilation, KH, KW, Wp, Ho, Wo):
    """One batch element per grid step.

    x_ref   : (1, C, H, W)        input tile (NCHW, straight from HBM)
    dw_ref  : (C, KH*KW)          depthwise weights
    pw_ref  : (Cout, C)           pointwise weights
    b_ref   : (Cout, 1)           bias
    o_ref   : (1, Cout, Ho*Wo)    lane-dense output slab
    xpf_ref : (C, (Hp+1)*Wp)      VMEM scratch: flattened zero-padded image
    acc_ref : (C, Ho*Wo)          VMEM scratch: compacted depthwise result
    """
    _, C, H, W = x_ref.shape

    # ---- build the zero-padded image in VMEM (flat, row stride Wp) ----
    xpf_ref[...] = jnp.zeros_like(xpf_ref)
    for h in range(H):                                   # H is static; unrolled
        off = (h + padding) * Wp + padding
        xpf_ref[:, off:off + W] = x_ref[0, :, h, :]

    xpf = xpf_ref[...]                                   # loaded once
    dw = dw_ref[...].astype(jnp.float32)                 # (C, KH*KW), hoisted
    pw = pw_ref[...].astype(jnp.float32)                 # (Cout, C)
    bias = b_ref[...].astype(jnp.float32)                # (Cout, 1)

    if stride == 1:
        # ---- depthwise on lane-dense flattened spatial vectors ----
        # Wide accumulator keeps the padded row stride Wp: output pixel (oh, ow)
        # lives at wide index oh*Wp + ow, so tap (kh, kw) is a pure lane-offset
        # slice of the flat padded image (zeros of the halo are real zeros).
        accw = jnp.zeros((C, Ho * Wp), jnp.float32)
        for kh in range(KH):
            for kw in range(KW):
                k = kh * KW + kw
                s = (kh * Wp + kw) * dilation
                patch = lax.slice(xpf, (0, s), (C, s + Ho * Wp))
                accw = accw + patch.astype(jnp.float32) * dw[:, k:k + 1]
        # Compact: drop the (Wp - Wo) garbage columns of every output row.
        for oh in range(Ho):
            acc_ref[:, oh * Wo:(oh + 1) * Wo] = lax.slice(
                accw, (0, oh * Wp), (C, oh * Wp + Wo))
    else:
        # TODO(synk): stride>1 fallback uses strided lane slices; for production
        # strides pre-decimate rows via the index_map instead.
        for oh in range(Ho):
            row_acc = jnp.zeros((C, Wo), jnp.float32)
            for kh in range(KH):
                for kw in range(KW):
                    k = kh * KW + kw
                    start = (oh * stride + kh * dilation) * Wp + kw * dilation
                    row = lax.slice(xpf, (0, start),
                                    (C, start + (Wo - 1) * stride + 1),
                                    (1, stride))
                    row_acc = row_acc + row.astype(jnp.float32) * dw[:, k:k + 1]
            acc_ref[:, oh * Wo:(oh + 1) * Wo] = row_acc

    acc = acc_ref[...]                                   # (C, Ho*Wo)

    # ---- pointwise 1x1 conv: Cout x C unrolled VPU broadcast-MACs + bias ----
    out = pw[:, 0:1] * acc[0:1, :]
    for c in range(1, C):
        out = out + pw[:, c:c + 1] * acc[c:c + 1, :]
    out = out + bias                                     # (Cout,1) lane broadcast

    o_ref[0] = out.astype(o_ref.dtype)                   # single lane-dense store


def depth_separable_conv2d(x_nchw, dw_weight, pw_weight, bias=None, *,
                           stride=1, padding=0, dilation=1):
    """Fused depthwise + pointwise conv matching the PyTorch module.

    x_nchw   : (N, C, H, W)          PyTorch NCHW input
    dw_weight: (C, 1, KH, KW)        depthwise nn.Conv2d weight (groups=C, no bias)
    pw_weight: (Cout, C, 1, 1)       pointwise nn.Conv2d weight
    bias     : (Cout,) or None
    returns  : (N, Cout, Ho, Wo)     PyTorch NCHW output
    """
    N, C, H, W = x_nchw.shape
    Cout = pw_weight.shape[0]
    KH, KW = dw_weight.shape[2], dw_weight.shape[3]

    Ho = (H + 2 * padding - dilation * (KH - 1) - 1) // stride + 1
    Wo = (W + 2 * padding - dilation * (KW - 1) - 1) // stride + 1
    Hp = H + 2 * padding
    Wp = W + 2 * padding

    # Tiny parameter re-layouts only (C*KH*KW + Cout*C + Cout elements); the
    # activation tensor goes straight through in NCHW (no extra HBM passes).
    dw = dw_weight.reshape(C, KH * KW)
    pw = pw_weight.reshape(Cout, C)
    if bias is None:
        b = jnp.zeros((Cout, 1), x_nchw.dtype)
    else:
        b = bias.reshape(Cout, 1)

    kernel = functools.partial(
        _dsconv_kernel, stride=stride, padding=padding, dilation=dilation,
        KH=KH, KW=KW, Wp=Wp, Ho=Ho, Wo=Wo)

    out_flat = pl.pallas_call(
        kernel,
        out_shape=jax.ShapeDtypeStruct((N, Cout, Ho * Wo), x_nchw.dtype),
        grid=(N,),
        in_specs=[
            pl.BlockSpec((1, C, H, W), lambda n: (n, 0, 0, 0)),
            pl.BlockSpec((C, KH * KW), lambda n: (0, 0)),
            pl.BlockSpec((Cout, C), lambda n: (0, 0)),
            pl.BlockSpec((Cout, 1), lambda n: (0, 0)),
        ],
        out_specs=pl.BlockSpec((1, Cout, Ho * Wo), lambda n: (n, 0, 0)),
        scratch_shapes=[
            pltpu.VMEM((C, (Hp + 1) * Wp), x_nchw.dtype),   # padded image (flat)
            pltpu.VMEM((C, Ho * Wo), jnp.float32),          # compacted depthwise acc
        ],
        compiler_params=pltpu.CompilerParams(
            dimension_semantics=("parallel",)),
    )(x_nchw, dw, pw, b)

    # Metadata-only reshape back to NCHW.
    return out_flat.reshape(N, Cout, Ho, Wo)


def _reference(x_nchw, dw_weight, pw_weight, bias, *, stride, padding, dilation):
    C = x_nchw.shape[1]
    dw_out = lax.conv_general_dilated(
        x_nchw, dw_weight,
        window_strides=(stride, stride),
        padding=[(padding, padding), (padding, padding)],
        rhs_dilation=(dilation, dilation),
        dimension_numbers=("NCHW", "OIHW", "NCHW"),
        feature_group_count=C,
    )
    pw_out = lax.conv_general_dilated(
        dw_out, pw_weight,
        window_strides=(1, 1),
        padding="VALID",
        dimension_numbers=("NCHW", "OIHW", "NCHW"),
    )
    return pw_out + bias[None, :, None, None]


if __name__ == "__main__":
    # Module config: DepthSeparableConv2d(in_channels=4, out_channels=8,
    #                                     kernel_size=3, stride=1, padding=1, bias=True)
    N, C, H, W = 2, 4, 16, 16
    Cout, K = 8, 3
    stride, padding, dilation = 1, 1, 1

    key = jax.random.PRNGKey(0)
    k_x, k_dw, k_pw, k_b = jax.random.split(key, 4)

    x = jax.random.normal(k_x, (N, C, H, W), dtype=jnp.float32)
    # Parameter shapes match nn.Conv2d exactly (deterministic synthetic init).
    dw_weight = jax.random.normal(k_dw, (C, 1, K, K), dtype=jnp.float32) * 0.2
    pw_weight = jax.random.normal(k_pw, (Cout, C, 1, 1), dtype=jnp.float32) * 0.2
    bias = jax.random.normal(k_b, (Cout,), dtype=jnp.float32) * 0.1

    fn = jax.jit(functools.partial(
        depth_separable_conv2d, stride=stride, padding=padding, dilation=dilation))
    out = jax.block_until_ready(fn(x, dw_weight, pw_weight, bias))

    ref = _reference(x, dw_weight, pw_weight, bias,
                     stride=stride, padding=padding, dilation=dilation)
    assert out.shape == (N, Cout, H, W), out.shape
    assert jnp.allclose(out, ref, atol=1e-4, rtol=1e-4), "mismatch vs XLA conv reference"

    print("KERNEL_OK")
</pallas_src>

<mosaic_0001>
module attributes {stable_mosaic.version = 11 : i64} {
  func.func @_dsconv_kernel(%arg0: i32, %arg1: memref<1x4x16x16xf32, #tpu.memory_space<vmem>>, %arg2: memref<4x9xf32, #tpu.memory_space<vmem>>, %arg3: memref<8x4xf32, #tpu.memory_space<vmem>>, %arg4: memref<8x1xf32, #tpu.memory_space<vmem>>, %arg5: memref<1x8x256xf32, #tpu.memory_space<vmem>>, %arg6: memref<4x342xf32, #tpu.memory_space<vmem>>, %arg7: memref<4x256xf32, #tpu.memory_space<vmem>>) attributes {dimension_semantics = [#tpu.dimension_semantics<parallel>], iteration_bounds = array<i64: 2>, scalar_prefetch = 0 : i64, scratch_operands = 2 : i64, tpu.core_type = #tpu.core_type<tc>, window_params = [{transform_indices = @transform_0, window_bounds = array<i64: 1, 4, 16, 16>}, {pipeline_mode = #tpu.pipeline_mode<synchronous>, transform_indices = @transform_1, window_bounds = array<i64: 4, 9>}, {pipeline_mode = #tpu.pipeline_mode<synchronous>, transform_indices = @transform_2, window_bounds = array<i64: 8, 4>}, {pipeline_mode = #tpu.pipeline_mode<synchronous>, transform_indices = @transform_3, window_bounds = array<i64: 8, 1>}, {transform_indices = @transform_4, window_bounds = array<i64: 1, 8, 256>}]} {
    %cst = arith.constant 0.000000e+00 : f32
    %0 = vector.broadcast %cst : f32 to vector<4x342xf32>
    %c0 = arith.constant 0 : index
    %c0_0 = arith.constant 0 : index
    %1 = vector.load %arg6[%c0, %c0_0] : memref<4x342xf32, #tpu.memory_space<vmem>>, vector<4x342xf32>
    tpu.vector_store %arg6[%c0, %c0_0], %0 {strides = array<i32>} : memref<4x342xf32, #tpu.memory_space<vmem>>, vector<4x342xf32>,
    %c0_1 = arith.constant 0 : index
    %c0_2 = arith.constant 0 : index
    %c0_3 = arith.constant 0 : index
    %c0_4 = arith.constant 0 : index
    %2 = vector.load %arg1[%c0_1, %c0_2, %c0_3, %c0_4] : memref<1x4x16x16xf32, #tpu.memory_space<vmem>>, vector<1x4x1x16xf32>
    %3 = vector.shape_cast %2 : vector<1x4x1x16xf32> to vector<4x16xf32>
    %c0_5 = arith.constant 0 : index
    %c19 = arith.constant 19 : index
    %4 = vector.load %arg6[%c0_5, %c19] : memref<4x342xf32, #tpu.memory_space<vmem>>, vector<4x16xf32>
    tpu.vector_store %arg6[%c0_5, %c19], %3 {strides = array<i32>} : memref<4x342xf32, #tpu.memory_space<vmem>>, vector<4x16xf32>,
    %c0_6 = arith.constant 0 : index
    %c0_7 = arith.constant 0 : index
    %c1 = arith.constant 1 : index
    %c0_8 = arith.constant 0 : index
    %5 = vector.load %arg1[%c0_6, %c0_7, %c1, %c0_8] : memref<1x4x16x16xf32, #tpu.memory_space<vmem>>, vector<1x4x1x16xf32>
    %6 = vector.shape_cast %5 : vector<1x4x1x16xf32> to vector<4x16xf32>
    %c0_9 = arith.constant 0 : index
    %c37 = arith.constant 37 : index
    %7 = vector.load %arg6[%c0_9, %c37] : memref<4x342xf32, #tpu.memory_space<vmem>>, vector<4x16xf32>
    tpu.vector_store %arg6[%c0_9, %c37], %6 {strides = array<i32>} : memref<4x342xf32, #tpu.memory_space<vmem>>, vector<4x16xf32>,
    %c0_10 = arith.constant 0 : index
    %c0_11 = arith.constant 0 : index
    %c2 = arith.constant 2 : index
    %c0_12 = arith.constant 0 : index
    %8 = vector.load %arg1[%c0_10, %c0_11, %c2, %c0_12] : memref<1x4x16x16xf32, #tpu.memory_space<vmem>>, vector<1x4x1x16xf32>
    %9 = vector.shape_cast %8 : vector<1x4x1x16xf32> to vector<4x16xf32>
    %c0_13 = arith.constant 0 : index
    %c55 = arith.constant 55 : index
    %10 = vector.load %arg6[%c0_13, %c55] : memref<4x342xf32, #tpu.memory_space<vmem>>, vector<4x16xf32>
    tpu.vector_store %arg6[%c0_13, %c55], %9 {strides = array<i32>} : memref<4x342xf32, #tpu.memory_space<vmem>>, vector<4x16xf32>,
    %c0_14 = arith.constant 0 : index
    %c0_15 = arith.constant 0 : index
    %c3 = arith.constant 3 : index
    %c0_16 = arith.constant 0 : index
    %11 = vector.load %arg1[%c0_14, %c0_15, %c3, %c0_16] : memref<1x4x16x16xf32, #tpu.memory_space<vmem>>, vector<1x4x1x16xf32>
    %12 = vector.shape_cast %11 : vector<1x4x1x16xf32> to vector<4x16xf32>
    %c0_17 = arith.constant 0 : index
    %c73 = arith.constant 73 : index
    %13 = vector.load %arg6[%c0_17, %c73] : memref<4x342xf32, #tpu.memory_space<vmem>>, vector<4x16xf32>
    tpu.vector_store %arg6[%c0_17, %c73], %12 {strides = array<i32>} : memref<4x342xf32, #tpu.memory_space<vmem>>, vector<4x16xf32>,
    %c0_18 = arith.constant 0 : index
    %c0_19 = arith.constant 0 : index
    %c4 = arith.constant 4 : index
    %c0_20 = arith.constant 0 : index
    %14 = vector.load %arg1[%c0_18, %c0_19, %c4, %c0_20] : memref<1x4x16x16xf32, #tpu.memory_space<vmem>>, vector<1x4x1x16xf32>
    %15 = vector.shape_cast %14 : vector<1x4x1x16xf32> to vector<4x16xf32>
    %c0_21 = arith.constant 0 : index
    %c91 = arith.constant 91 : index
    %16 = vector.load %arg6[%c0_21, %c91] : memref<4x342xf32, #tpu.memory_space<vmem>>, vector<4x16xf32>
    tpu.vector_store %arg6[%c0_21, %c91], %15 {strides = array<i32>} : memref<4x342xf32, #tpu.memory_space<vmem>>, vector<4x16xf32>,
    %c0_22 = arith.constant 0 : index
    %c0_23 = arith.constant 0 : index
    %c5 = arith.constant 5 : index
    %c0_24 = arith.constant 0 : index
    %17 = vector.load %arg1[%c0_22, %c0_23, %c5, %c0_24] : memref<1x4x16x16xf32, #tpu.memory_space<vmem>>, vector<1x4x1x16xf32>
    %18 = vector.shape_cast %17 : vector<1x4x1x16xf32> to vector<4x16xf32>
    %c0_25 = arith.constant 0 : index
    %c109 = arith.constant 109 : index
    %19 = vector.load %arg6[%c0_25, %c109] : memref<4x342xf32, #tpu.memory_space<vmem>>, vector<4x16xf32>
    tpu.vector_store %arg6[%c0_25, %c109], %18 {strides = array<i32>} : memref<4x342xf32, #tpu.memory_space<vmem>>, vector<4x16xf32>,
    %c0_26 = arith.constant 0 : index
    %c0_27 = arith.constant 0 : index
    %c6 = arith.constant 6 : index
    %c0_28 = arith.constant 0 : index
    %20 = vector.load %arg1[%c0_26, %c0_27, %c6, %c0_28] : memref<1x4x16x16xf32, #tpu.memory_space<vmem>>, vector<1x4x1x16xf32>
    %21 = vector.shape_cast %20 : vector<1x4x1x16xf32> to vector<4x16xf32>
    %c0_29 = arith.constant 0 : index
    %c127 = arith.constant 127 : index
    %22 = vector.load %arg6[%c0_29, %c127] : memref<4x342xf32, #tpu.memory_space<vmem>>, vector<4x16xf32>
    tpu.vector_store %arg6[%c0_29, %c127], %21 {strides = array<i32>} : memref<4x342xf32, #tpu.memory_space<vmem>>, vector<4x16xf32>,
    %c0_30 = arith.constant 0 : index
    %c0_31 = arith.constant 0 : index
    %c7 = arith.constant 7 : index
    %c0_32 = arith.constant 0 : index
    %23 = vector.load %arg1[%c0_30, %c0_31, %c7, %c0_32] : memref<1x4x16x16xf32, #tpu.memory_space<vmem>>, vector<1x4x1x16xf32>
    %24 = vector.shape_cast %23 : vector<1x4x1x16xf32> to vector<4x16xf32>
    %c0_33 = arith.constant 0 : index
    %c145 = arith.constant 145 : index
    %25 = vector.load %arg6[%c0_33, %c145] : memref<4x342xf32, #tpu.memory_space<vmem>>, vector<4x16xf32>
    tpu.vector_store %arg6[%c0_33, %c145], %24 {strides = array<i32>} : memref<4x342xf32, #tpu.memory_space<vmem>>, vector<4x16xf32>,
    %c0_34 = arith.constant 0 : index
    %c0_35 = arith.constant 0 : index
    %c8 = arith.constant 8 : index
    %c0_36 = arith.constant 0 : index
    %26 = vector.load %arg1[%c0_34, %c0_35, %c8, %c0_36] : memref<1x4x16x16xf32, #tpu.memory_space<vmem>>, vector<1x4x1x16xf32>
    %27 = vector.shape_cast %26 : vector<1x4x1x16xf32> to vector<4x16xf32>
    %c0_37 = arith.constant 0 : index
    %c163 = arith.constant 163 : index
    %28 = vector.load %arg6[%c0_37, %c163] : memref<4x342xf32, #tpu.memory_space<vmem>>, vector<4x16xf32>
    tpu.vector_store %arg6[%c0_37, %c163], %27 {strides = array<i32>} : memref<4x342xf32, #tpu.memory_space<vmem>>, vector<4x16xf32>,
    %c0_38 = arith.constant 0 : index
    %c0_39 = arith.constant 0 : index
    %c9 = arith.constant 9 : index
    %c0_40 = arith.constant 0 : index
    %29 = vector.load %arg1[%c0_38, %c0_39, %c9, %c0_40] : memref<1x4x16x16xf32, #tpu.memory_space<vmem>>, vector<1x4x1x16xf32>
    %30 = vector.shape_cast %29 : vector<1x4x1x16xf32> to vector<4x16xf32>
    %c0_41 = arith.constant 0 : index
    %c181 = arith.constant 181 : index
    %31 = vector.load %arg6[%c0_41, %c181] : memref<4x342xf32, #tpu.memory_space<vmem>>, vector<4x16xf32>
    tpu.vector_store %arg6[%c0_41, %c181], %30 {strides = array<i32>} : memref<4x342xf32, #tpu.memory_space<vmem>>, vector<4x16xf32>,
    %c0_42 = arith.constant 0 : index
    %c0_43 = arith.constant 0 : index
    %c10 = arith.constant 10 : index
    %c0_44 = arith.constant 0 : index
    %32 = vector.load %arg1[%c0_42, %c0_43, %c10, %c0_44] : memref<1x4x16x16xf32, #tpu.memory_space<vmem>>, vector<1x4x1x16xf32>
    %33 = vector.shape_cast %32 : vector<1x4x1x16xf32> to vector<4x16xf32>
    %c0_45 = arith.constant 0 : index
    %c199 = arith.constant 199 : index
    %34 = vector.load %arg6[%c0_45, %c199] : memref<4x342xf32, #tpu.memory_space<vmem>>, vector<4x16xf32>
    tpu.vector_store %arg6[%c0_45, %c199], %33 {strides = array<i32>} : memref<4x342xf32, #tpu.memory_space<vmem>>, vector<4x16xf32>,
    %c0_46 = arith.constant 0 : index
    %c0_47 = arith.constant 0 : index
    %c11 = arith.constant 11 : index
    %c0_48 = arith.constant 0 : index
    %35 = vector.load %arg1[%c0_46, %c0_47, %c11, %c0_48] : memref<1x4x16x16xf32, #tpu.memory_space<vmem>>, vector<1x4x1x16xf32>
    %36 = vector.shape_cast %35 : vector<1x4x1x16xf32> to vector<4x16xf32>
    %c0_49 = arith.constant 0 : index
    %c217 = arith.constant 217 : index
    %37 = vector.load %arg6[%c0_49, %c217] : memref<4x342xf32, #tpu.memory_space<vmem>>, vector<4x16xf32>
    tpu.vector_store %arg6[%c0_49, %c217], %36 {strides = array<i32>} : memref<4x342xf32, #tpu.memory_space<vmem>>, vector<4x16xf32>,
    %c0_50 = arith.constant 0 : index
    %c0_51 = arith.constant 0 : index
    %c12 = arith.constant 12 : index
    %c0_52 = arith.constant 0 : index
    %38 = vector.load %arg1[%c0_50, %c0_51, %c12, %c0_52] : memref<1x4x16x16xf32, #tpu.memory_space<vmem>>, vector<1x4x1x16xf32>
    %39 = vector.shape_cast %38 : vector<1x4x1x16xf32> to vector<4x16xf32>
    %c0_53 = arith.constant 0 : index
    %c235 = arith.constant 235 : index
    %40 = vector.load %arg6[%c0_53, %c235] : memref<4x342xf32, #tpu.memory_space<vmem>>, vector<4x16xf32>
    tpu.vector_store %arg6[%c0_53, %c235], %39 {strides = array<i32>} : memref<4x342xf32, #tpu.memory_space<vmem>>, vector<4x16xf32>,
    %c0_54 = arith.constant 0 : index
    %c0_55 = arith.constant 0 : index
    %c13 = arith.constant 13 : index
    %c0_56 = arith.constant 0 : index
    %41 = vector.load %arg1[%c0_54, %c0_55, %c13, %c0_56] : memref<1x4x16x16xf32, #tpu.memory_space<vmem>>, vector<1x4x1x16xf32>
    %42 = vector.shape_cast %41 : vector<1x4x1x16xf32> to vector<4x16xf32>
    %c0_57 = arith.constant 0 : index
    %c253 = arith.constant 253 : index
    %43 = vector.load %arg6[%c0_57, %c253] : memref<4x342xf32, #tpu.memory_space<vmem>>, vector<4x16xf32>
    tpu.vector_store %arg6[%c0_57, %c253], %42 {strides = array<i32>} : memref<4x342xf32, #tpu.memory_space<vmem>>, vector<4x16xf32>,
    %c0_58 = arith.constant 0 : index
    %c0_59 = arith.constant 0 : index
    %c14 = arith.constant 14 : index
    %c0_60 = arith.constant 0 : index
    %44 = vector.load %arg1[%c0_58, %c0_59, %c14, %c0_60] : memref<1x4x16x16xf32, #tpu.memory_space<vmem>>, vector<1x4x1x16xf32>
    %45 = vector.shape_cast %44 : vector<1x4x1x16xf32> to vector<4x16xf32>
    %c0_61 = arith.constant 0 : index
    %c271 = arith.constant 271 : index
    %46 = vector.load %arg6[%c0_61, %c271] : memref<4x342xf32, #tpu.memory_space<vmem>>, vector<4x16xf32>
    tpu.vector_store %arg6[%c0_61, %c271], %45 {strides = array<i32>} : memref<4x342xf32, #tpu.memory_space<vmem>>, vector<4x16xf32>,
    %c0_62 = arith.constant 0 : index
    %c0_63 = arith.constant 0 : index
    %c15 = arith.constant 15 : index
    %c0_64 = arith.constant 0 : index
    %47 = vector.load %arg1[%c0_62, %c0_63, %c15, %c0_64] : memref<1x4x16x16xf32, #tpu.memory_space<vmem>>, vector<1x4x1x16xf32>
    %48 = vector.shape_cast %47 : vector<1x4x1x16xf32> to vector<4x16xf32>
    %c0_65 = arith.constant 0 : index
    %c289 = arith.constant 289 : index
    %49 = vector.load %arg6[%c0_65, %c289] : memref<4x342xf32, #tpu.memory_space<vmem>>, vector<4x16xf32>
    tpu.vector_store %arg6[%c0_65, %c289], %48 {strides = array<i32>} : memref<4x342xf32, #tpu.memory_space<vmem>>, vector<4x16xf32>,
    %c0_66 = arith.constant 0 : index
    %c0_67 = arith.constant 0 : index
    %50 = vector.load %arg6[%c0_66, %c0_67] : memref<4x342xf32, #tpu.memory_space<vmem>>, vector<4x342xf32>
    %c0_68 = arith.constant 0 : index
    %c0_69 = arith.constant 0 : index
    %51 = vector.load %arg2[%c0_68, %c0_69] : memref<4x9xf32, #tpu.memory_space<vmem>>, vector<4x9xf32>
    %c0_70 = arith.constant 0 : index
    %c0_71 = arith.constant 0 : index
    %52 = vector.load %arg3[%c0_70, %c0_71] : memref<8x4xf32, #tpu.memory_space<vmem>>, vector<8x4xf32>
    %c0_72 = arith.constant 0 : index
    %c0_73 = arith.constant 0 : index
    %53 = vector.load %arg4[%c0_72, %c0_73] : memref<8x1xf32, #tpu.memory_space<vmem>>, vector<8x1xf32>
    %cst_74 = arith.constant 0.000000e+00 : f32
    %54 = vector.broadcast %cst_74 : f32 to vector<4x288xf32>
    %55 = vector.extract_strided_slice %50 {offsets = [0, 0], sizes = [4, 288], strides = [1, 1]} : vector<4x342xf32> to vector<4x288xf32>
    %56 = vector.extract_strided_slice %51 {offsets = [0, 0], sizes = [4, 1], strides = [1, 1]} : vector<4x9xf32> to vector<4x1xf32>
    %57 = vector.broadcast %56 : vector<4x1xf32> to vector<4x288xf32>
    %58 = arith.mulf %55, %57 : vector<4x288xf32>
    %59 = arith.addf %54, %58 : vector<4x288xf32>
    %60 = vector.extract_strided_slice %50 {offsets = [0, 1], sizes = [4, 288], strides = [1, 1]} : vector<4x342xf32> to vector<4x288xf32>
    %61 = vector.extract_strided_slice %51 {offsets = [0, 1], sizes = [4, 1], strides = [1, 1]} : vector<4x9xf32> to vector<4x1xf32>
    %62 = vector.broadcast %61 : vector<4x1xf32> to vector<4x288xf32>
    %63 = arith.mulf %60, %62 : vector<4x288xf32>
    %64 = arith.addf %59, %63 : vector<4x288xf32>
    %65 = vector.extract_strided_slice %50 {offsets = [0, 2], sizes = [4, 288], strides = [1, 1]} : vector<4x342xf32> to vector<4x288xf32>
    %66 = vector.extract_strided_slice %51 {offsets = [0, 2], sizes = [4, 1], strides = [1, 1]} : vector<4x9xf32> to vector<4x1xf32>
    %67 = vector.broadcast %66 : vector<4x1xf32> to vector<4x288xf32>
    %68 = arith.mulf %65, %67 : vector<4x288xf32>
    %69 = arith.addf %64, %68 : vector<4x288xf32>
    %70 = vector.extract_strided_slice %50 {offsets = [0, 18], sizes = [4, 288], strides = [1, 1]} : vector<4x342xf32> to vector<4x288xf32>
    %71 = vector.extract_strided_slice %51 {offsets = [0, 3], sizes = [4, 1], strides = [1, 1]} : vector<4x9xf32> to vector<4x1xf32>
    %72 = vector.broadcast %71 : vector<4x1xf32> to vector<4x288xf32>
    %73 = arith.mulf %70, %72 : vector<4x288xf32>
    %74 = arith.addf %69, %73 : vector<4x288xf32>
    %75 = vector.extract_strided_slice %50 {offsets = [0, 19], sizes = [4, 288], strides = [1, 1]} : vector<4x342xf32> to vector<4x288xf32>
    %76 = vector.extract_strided_slice %51 {offsets = [0, 4], sizes = [4, 1], strides = [1, 1]} : vector<4x9xf32> to vector<4x1xf32>
    %77 = vector.broadcast %76 : vector<4x1xf32> to vector<4x288xf32>
    %78 = arith.mulf %75, %77 : vector<4x288xf32>
    %79 = arith.addf %74, %78 : vector<4x288xf32>
    %80 = vector.extract_strided_slice %50 {offsets = [0, 20], sizes = [4, 288], strides = [1, 1]} : vector<4x342xf32> to vector<4x288xf32>
    %81 = vector.extract_strided_slice %51 {offsets = [0, 5], sizes = [4, 1], strides = [1, 1]} : vector<4x9xf32> to vector<4x1xf32>
    %82 = vector.broadcast %81 : vector<4x1xf32> to vector<4x288xf32>
    %83 = arith.mulf %80, %82 : vector<4x288xf32>
    %84 = arith.addf %79, %83 : vector<4x288xf32>
    %85 = vector.extract_strided_slice %50 {offsets = [0, 36], sizes = [4, 288], strides = [1, 1]} : vector<4x342xf32> to vector<4x288xf32>
    %86 = vector.extract_strided_slice %51 {offsets = [0, 6], sizes = [4, 1], strides = [1, 1]} : vector<4x9xf32> to vector<4x1xf32>
    %87 = vector.broadcast %86 : vector<4x1xf32> to vector<4x288xf32>
    %88 = arith.mulf %85, %87 : vector<4x288xf32>
    %89 = arith.addf %84, %88 : vector<4x288xf32>
    %90 = vector.extract_strided_slice %50 {offsets = [0, 37], sizes = [4, 288], strides = [1, 1]} : vector<4x342xf32> to vector<4x288xf32>
    %91 = vector.extract_strided_slice %51 {offsets = [0, 7], sizes = [4, 1], strides = [1, 1]} : vector<4x9xf32> to vector<4x1xf32>
    %92 = vector.broadcast %91 : vector<4x1xf32> to vector<4x288xf32>
    %93 = arith.mulf %90, %92 : vector<4x288xf32>
    %94 = arith.addf %89, %93 : vector<4x288xf32>
    %95 = vector.extract_strided_slice %50 {offsets = [0, 38], sizes = [4, 288], strides = [1, 1]} : vector<4x342xf32> to vector<4x288xf32>
    %96 = vector.extract_strided_slice %51 {offsets = [0, 8], sizes = [4, 1], strides = [1, 1]} : vector<4x9xf32> to vector<4x1xf32>
    %97 = vector.broadcast %96 : vector<4x1xf32> to vector<4x288xf32>
    %98 = arith.mulf %95, %97 : vector<4x288xf32>
    %99 = arith.addf %94, %98 : vector<4x288xf32>
    %100 = vector.extract_strided_slice %99 {offsets = [0, 0], sizes = [4, 16], strides = [1, 1]} : vector<4x288xf32> to vector<4x16xf32>
    %c0_75 = arith.constant 0 : index
    %c0_76 = arith.constant 0 : index
    %101 = vector.load %arg7[%c0_75, %c0_76] : memref<4x256xf32, #tpu.memory_space<vmem>>, vector<4x16xf32>
    tpu.vector_store %arg7[%c0_75, %c0_76], %100 {strides = array<i32>} : memref<4x256xf32, #tpu.memory_space<vmem>>, vector<4x16xf32>,
    %102 = vector.extract_strided_slice %99 {offsets = [0, 18], sizes = [4, 16], strides = [1, 1]} : vector<4x288xf32> to vector<4x16xf32>
    %c0_77 = arith.constant 0 : index
    %c16 = arith.constant 16 : index
    %103 = vector.load %arg7[%c0_77, %c16] : memref<4x256xf32, #tpu.memory_space<vmem>>, vector<4x16xf32>
    tpu.vector_store %arg7[%c0_77, %c16], %102 {strides = array<i32>} : memref<4x256xf32, #tpu.memory_space<vmem>>, vector<4x16xf32>,
    %104 = vector.extract_strided_slice %99 {offsets = [0, 36], sizes = [4, 16], strides = [1, 1]} : vector<4x288xf32> to vector<4x16xf32>
    %c0_78 = arith.constant 0 : index
    %c32 = arith.constant 32 : index
    %105 = vector.load %arg7[%c0_78, %c32] : memref<4x256xf32, #tpu.memory_space<vmem>>, vector<4x16xf32>
    tpu.vector_store %arg7[%c0_78, %c32], %104 {strides = array<i32>} : memref<4x256xf32, #tpu.memory_space<vmem>>, vector<4x16xf32>,
    %106 = vector.extract_strided_slice %99 {offsets = [0, 54], sizes = [4, 16], strides = [1, 1]} : vector<4x288xf32> to vector<4x16xf32>
    %c0_79 = arith.constant 0 : index
    %c48 = arith.constant 48 : index
    %107 = vector.load %arg7[%c0_79, %c48] : memref<4x256xf32, #tpu.memory_space<vmem>>, vector<4x16xf32>
    tpu.vector_store %arg7[%c0_79, %c48], %106 {strides = array<i32>} : memref<4x256xf32, #tpu.memory_space<vmem>>, vector<4x16xf32>,
    %108 = vector.extract_strided_slice %99 {offsets = [0, 72], sizes = [4, 16], strides = [1, 1]} : vector<4x288xf32> to vector<4x16xf32>
    %c0_80 = arith.constant 0 : index
    %c64 = arith.constant 64 : index
    %109 = vector.load %arg7[%c0_80, %c64] : memref<4x256xf32, #tpu.memory_space<vmem>>, vector<4x16xf32>
    tpu.vector_store %arg7[%c0_80, %c64], %108 {strides = array<i32>} : memref<4x256xf32, #tpu.memory_space<vmem>>, vector<4x16xf32>,
    %110 = vector.extract_strided_slice %99 {offsets = [0, 90], sizes = [4, 16], strides = [1, 1]} : vector<4x288xf32> to vector<4x16xf32>
    %c0_81 = arith.constant 0 : index
    %c80 = arith.constant 80 : index
    %111 = vector.load %arg7[%c0_81, %c80] : memref<4x256xf32, #tpu.memory_space<vmem>>, vector<4x16xf32>
    tpu.vector_store %arg7[%c0_81, %c80], %110 {strides = array<i32>} : memref<4x256xf32, #tpu.memory_space<vmem>>, vector<4x16xf32>,
    %112 = vector.extract_strided_slice %99 {offsets = [0, 108], sizes = [4, 16], strides = [1, 1]} : vector<4x288xf32> to vector<4x16xf32>
    %c0_82 = arith.constant 0 : index
    %c96 = arith.constant 96 : index
    %113 = vector.load %arg7[%c0_82, %c96] : memref<4x256xf32, #tpu.memory_space<vmem>>, vector<4x16xf32>
    tpu.vector_store %arg7[%c0_82, %c96], %112 {strides = array<i32>} : memref<4x256xf32, #tpu.memory_space<vmem>>, vector<4x16xf32>,
    %114 = vector.extract_strided_slice %99 {offsets = [0, 126], sizes = [4, 16], strides = [1, 1]} : vector<4x288xf32> to vector<4x16xf32>
    %c0_83 = arith.constant 0 : index
    %c112 = arith.constant 112 : index
    %115 = vector.load %arg7[%c0_83, %c112] : memref<4x256xf32, #tpu.memory_space<vmem>>, vector<4x16xf32>
    tpu.vector_store %arg7[%c0_83, %c112], %114 {strides = array<i32>} : memref<4x256xf32, #tpu.memory_space<vmem>>, vector<4x16xf32>,
    %116 = vector.extract_strided_slice %99 {offsets = [0, 144], sizes = [4, 16], strides = [1, 1]} : vector<4x288xf32> to vector<4x16xf32>
    %c0_84 = arith.constant 0 : index
    %c128 = arith.constant 128 : index
    %117 = vector.load %arg7[%c0_84, %c128] : memref<4x256xf32, #tpu.memory_space<vmem>>, vector<4x16xf32>
    tpu.vector_store %arg7[%c0_84, %c128], %116 {strides = array<i32>} : memref<4x256xf32, #tpu.memory_space<vmem>>, vector<4x16xf32>,
    %118 = vector.extract_strided_slice %99 {offsets = [0, 162], sizes = [4, 16], strides = [1, 1]} : vector<4x288xf32> to vector<4x16xf32>
    %c0_85 = arith.constant 0 : index
    %c144 = arith.constant 144 : index
    %119 = vector.load %arg7[%c0_85, %c144] : memref<4x256xf32, #tpu.memory_space<vmem>>, vector<4x16xf32>
    tpu.vector_store %arg7[%c0_85, %c144], %118 {strides = array<i32>} : memref<4x256xf32, #tpu.memory_space<vmem>>, vector<4x16xf32>,
    %120 = vector.extract_strided_slice %99 {offsets = [0, 180], sizes = [4, 16], strides = [1, 1]} : vector<4x288xf32> to vector<4x16xf32>
    %c0_86 = arith.constant 0 : index
    %c160 = arith.constant 160 : index
    %121 = vector.load %arg7[%c0_86, %c160] : memref<4x256xf32, #tpu.memory_space<vmem>>, vector<4x16xf32>
    tpu.vector_store %arg7[%c0_86, %c160], %120 {strides = array<i32>} : memref<4x256xf32, #tpu.memory_space<vmem>>, vector<4x16xf32>,
    %122 = vector.extract_strided_slice %99 {offsets = [0, 198], sizes = [4, 16], strides = [1, 1]} : vector<4x288xf32> to vector<4x16xf32>
    %c0_87 = arith.constant 0 : index
    %c176 = arith.constant 176 : index
    %123 = vector.load %arg7[%c0_87, %c176] : memref<4x256xf32, #tpu.memory_space<vmem>>, vector<4x16xf32>
    tpu.vector_store %arg7[%c0_87, %c176], %122 {strides = array<i32>} : memref<4x256xf32, #tpu.memory_space<vmem>>, vector<4x16xf32>,
    %124 = vector.extract_strided_slice %99 {offsets = [0, 216], sizes = [4, 16], strides = [1, 1]} : vector<4x288xf32> to vector<4x16xf32>
    %c0_88 = arith.constant 0 : index
    %c192 = arith.constant 192 : index
    %125 = vector.load %arg7[%c0_88, %c192] : memref<4x256xf32, #tpu.memory_space<vmem>>, vector<4x16xf32>
    tpu.vector_store %arg7[%c0_88, %c192], %124 {strides = array<i32>} : memref<4x256xf32, #tpu.memory_space<vmem>>, vector<4x16xf32>,
    %126 = vector.extract_strided_slice %99 {offsets = [0, 234], sizes = [4, 16], strides = [1, 1]} : vector<4x288xf32> to vector<4x16xf32>
    %c0_89 = arith.constant 0 : index
    %c208 = arith.constant 208 : index
    %127 = vector.load %arg7[%c0_89, %c208] : memref<4x256xf32, #tpu.memory_space<vmem>>, vector<4x16xf32>
    tpu.vector_store %arg7[%c0_89, %c208], %126 {strides = array<i32>} : memref<4x256xf32, #tpu.memory_space<vmem>>, vector<4x16xf32>,
    %128 = vector.extract_strided_slice %99 {offsets = [0, 252], sizes = [4, 16], strides = [1, 1]} : vector<4x288xf32> to vector<4x16xf32>
    %c0_90 = arith.constant 0 : index
    %c224 = arith.constant 224 : index
    %129 = vector.load %arg7[%c0_90, %c224] : memref<4x256xf32, #tpu.memory_space<vmem>>, vector<4x16xf32>
    tpu.vector_store %arg7[%c0_90, %c224], %128 {strides = array<i32>} : memref<4x256xf32, #tpu.memory_space<vmem>>, vector<4x16xf32>,
    %130 = vector.extract_strided_slice %99 {offsets = [0, 270], sizes = [4, 16], strides = [1, 1]} : vector<4x288xf32> to vector<4x16xf32>
    %c0_91 = arith.constant 0 : index
    %c240 = arith.constant 240 : index
    %131 = vector.load %arg7[%c0_91, %c240] : memref<4x256xf32, #tpu.memory_space<vmem>>, vector<4x16xf32>
    tpu.vector_store %arg7[%c0_91, %c240], %130 {strides = array<i32>} : memref<4x256xf32, #tpu.memory_space<vmem>>, vector<4x16xf32>,
    %c0_92 = arith.constant 0 : index
    %c0_93 = arith.constant 0 : index
    %132 = vector.load %arg7[%c0_92, %c0_93] : memref<4x256xf32, #tpu.memory_space<vmem>>, vector<4x256xf32>
    %133 = vector.extract_strided_slice %52 {offsets = [0, 0], sizes = [8, 1], strides = [1, 1]} : vector<8x4xf32> to vector<8x1xf32>
    %134 = vector.extract_strided_slice %132 {offsets = [0, 0], sizes = [1, 256], strides = [1, 1]} : vector<4x256xf32> to vector<1x256xf32>
    %135 = vector.broadcast %133 : vector<8x1xf32> to vector<8x256xf32>
    %136 = vector.broadcast %134 : vector<1x256xf32> to vector<8x256xf32>
    %137 = arith.mulf %135, %136 : vector<8x256xf32>
    %138 = vector.extract_strided_slice %52 {offsets = [0, 1], sizes = [8, 1], strides = [1, 1]} : vector<8x4xf32> to vector<8x1xf32>
    %139 = vector.extract_strided_slice %132 {offsets = [1, 0], sizes = [1, 256], strides = [1, 1]} : vector<4x256xf32> to vector<1x256xf32>
    %140 = vector.broadcast %138 : vector<8x1xf32> to vector<8x256xf32>
    %141 = vector.broadcast %139 : vector<1x256xf32> to vector<8x256xf32>
    %142 = arith.mulf %140, %141 : vector<8x256xf32>
    %143 = arith.addf %137, %142 : vector<8x256xf32>
    %144 = vector.extract_strided_slice %52 {offsets = [0, 2], sizes = [8, 1], strides = [1, 1]} : vector<8x4xf32> to vector<8x1xf32>
    %145 = vector.extract_strided_slice %132 {offsets = [2, 0], sizes = [1, 256], strides = [1, 1]} : vector<4x256xf32> to vector<1x256xf32>
    %146 = vector.broadcast %144 : vector<8x1xf32> to vector<8x256xf32>
    %147 = vector.broadcast %145 : vector<1x256xf32> to vector<8x256xf32>
    %148 = arith.mulf %146, %147 : vector<8x256xf32>
    %149 = arith.addf %143, %148 : vector<8x256xf32>
    %150 = vector.extract_strided_slice %52 {offsets = [0, 3], sizes = [8, 1], strides = [1, 1]} : vector<8x4xf32> to vector<8x1xf32>
    %151 = vector.extract_strided_slice %132 {offsets = [3, 0], sizes = [1, 256], strides = [1, 1]} : vector<4x256xf32> to vector<1x256xf32>
    %152 = vector.broadcast %150 : vector<8x1xf32> to vector<8x256xf32>
    %153 = vector.broadcast %151 : vector<1x256xf32> to vector<8x256xf32>
    %154 = arith.mulf %152, %153 : vector<8x256xf32>
    %155 = arith.addf %149, %154 : vector<8x256xf32>
    %156 = vector.broadcast %53 : vector<8x1xf32> to vector<8x256xf32>
    %157 = arith.addf %155, %156 : vector<8x256xf32>
    %c0_94 = arith.constant 0 : index
    %c0_95 = arith.constant 0 : index
    %c0_96 = arith.constant 0 : index
    %158 = vector.load %arg5[%c0_94, %c0_95, %c0_96] : memref<1x8x256xf32, #tpu.memory_space<vmem>>, vector<1x8x256xf32>
    %159 = vector.shape_cast %158 : vector<1x8x256xf32> to vector<8x256xf32>
    %160 = vector.shape_cast %157 : vector<8x256xf32> to vector<1x8x256xf32>
    tpu.vector_store %arg5[%c0_94, %c0_95, %c0_96], %160 {strides = array<i32>} : memref<1x8x256xf32, #tpu.memory_space<vmem>>, vector<1x8x256xf32>,
    return
  }
  func.func @transform_0(%arg0: i32) -> (i32, i32, i32, i32) {
    %c0_i32 = arith.constant 0 : i32
    %c0_i32_0 = arith.constant 0 : i32
    %c0_i32_1 = arith.constant 0 : i32
    %c0_i32_2 = arith.constant 0 : i32
    return %arg0, %c0_i32, %c0_i32_0, %c0_i32_1 : i32, i32, i32, i32
  }
  func.func @transform_1(%arg0: i32) -> (i32, i32) {
    %c0_i32 = arith.constant 0 : i32
    %c0_i32_0 = arith.constant 0 : i32
    %c0_i32_1 = arith.constant 0 : i32
    return %c0_i32, %c0_i32_0 : i32, i32
  }
  func.func @transform_2(%arg0: i32) -> (i32, i32) {
    %c0_i32 = arith.constant 0 : i32
    %c0_i32_0 = arith.constant 0 : i32
    %c0_i32_1 = arith.constant 0 : i32
    return %c0_i32, %c0_i32_0 : i32, i32
  }
  func.func @transform_3(%arg0: i32) -> (i32, i32) {
    %c0_i32 = arith.constant 0 : i32
    %c0_i32_0 = arith.constant 0 : i32
    %c0_i32_1 = arith.constant 0 : i32
    return %c0_i32, %c0_i32_0 : i32, i32
  }
  func.func @transform_4(%arg0: i32) -> (i32, i32, i32) {
    %c0_i32 = arith.constant 0 : i32
    %c0_i32_0 = arith.constant 0 : i32
    %c0_i32_1 = arith.constant 0 : i32
    return %arg0, %c0_i32, %c0_i32_0 : i32, i32, i32
  }
}

</mosaic_0001>

<llo_original>
// kernel: depth_separable_conv2d.1
$region0: #{depth_separable_conv2d.1}
  #allocation0 [shape = 'u32[]', space=smem, size = 0x4, offset = 0x4, fixed_abs, tag = 'smem constant byte address 0x4 - core index']
  #allocation1 [shape = 'u32[72,128]{1,0:T(1,128)}', space=vmem, size = 0x9000, scoped, tag = 'internal scratch']
  #allocation2 [shape = 'f32[4,342]{1,0:T(4,128)}', space=vmem, size = 0x1800, scoped, tag = 'scratch operand']
  #allocation3 [shape = 'f32[4,256]{1,0:T(4,128)}', space=vmem, size = 0x1000, scoped, tag = 'scratch operand']
  %s0 = inlined_call_operand.hbm [shape: f32[2,4,16,16], index: 0, kind: input, shape index: {}]
  %s1 = inlined_call_operand.vmem [shape: f32[4,9], index: 1, kind: input, shape index: {}]
  %s2 = inlined_call_operand.vmem [shape: f32[8,4], index: 2, kind: input, shape index: {}]
  %s3 = inlined_call_operand.vmem [shape: f32[8,1], index: 3, kind: input, shape index: {}]
  %s4 = inlined_call_operand.vmem [shape: f32[2,8,256], index: 4, kind: output, shape index: {}]
  %s5 = sld [smem:[#allocation0]]
  $region53: #{depth_separable_conv2d.1} parent=0
    _
  %s7 = ssub.s32 1, %s5
  %s8 = scalar_select 0, %s7, %s5
  $region1: #{depth_separable_conv2d.1} parent=0
    #allocation4 [shape = 'u8[65536]{0}', space=vmem, size = 0x10000, scoped, tag = 'input window, operand 0']
    #allocation5 [shape = 's32[2]{0}', space=sflag, size = 0x8, scoped, tag = 'scoped memory for depth_separable_conv2d.1']
    %9 = vsyncpa [#allocation5], 0
    %s10 = scalar_lea.sflag [#allocation5], 1
    %11 = vsyncpa %s10, 0
    loop: start=0, step=1, limit=4
    $region2: #{depth_separable_conv2d.1} parent=1 // loop_pre_header
      _
    $region3: #{depth_separable_conv2d.1} parent=1 // loop_header
      %s13 = sphi 0, %s17
      %p14 = scmp.ge.s32.totalorder %s13, 4
      %s23 = sphi 0, %s25
      %s26 = sphi 0, %s23
      %s27 = sphi 0, %s26
      %s43 = sphi 0, %s27
      %s47 = sphi 0, %s47
      %s49 = sphi 0, %s47
      %s50 = sphi 0, %s49
      %s64 = sphi 0, %s50
      %s68 = sphi 0, %s68
      %s70 = sphi 0, %s68
      %s71 = sphi 0, %s70
      %s85 = sphi 0, %s71
      %s89 = sphi 0, %s89
      %s91 = sphi 0, %s89
      %s92 = sphi 0, %s91
      %s106 = sphi 0, %s92
      %s112 = sphi 0, %s114
      %s115 = sphi 0, %s112
      %s116 = sphi 0, %s115
      %s132 = sphi 0, %s116
    $region4: #{depth_separable_conv2d.1} parent=1 // loop_header_branch
      %16 = sbr.rel (%p14) target = $region8
    $region5: #{depth_separable_conv2d.1} parent=1 // loop_body
      %s18 = ssub.s32 %s13, 1
      %s19 = ssub.s32 %s13, 2
      %s20 = sadd.s32 %s13, 1
      %s21 = ssub.s32 %s13, %s20
      %p22 = scmp.eq.s32.totalorder %s21, 0
      %s24 = sadd.s32 %s23, 1
      %s25 = scalar_select %p22, %s23, %s24
      %p28 = pneg %p22
      %p29 = scmp.eq.s32.totalorder %s13, 1
      %p30 = por %p28, %p29
      %p31 = scmp.ne.s32.totalorder %s23, %s26
      %p32 = scmp.eq.s32.totalorder %s13, 0
      %p33 = por %p31, %p32
      %p34 = scmp.ne.s32.totalorder %s23, %s26
      %p35 = scmp.eq.s32.totalorder %s18, 1
      %p36 = por %p34, %p35
      %p37 = scmp.ne.s32.totalorder %s26, %s27
      %p38 = scmp.eq.s32.totalorder %s18, 0
      %p39 = por %p37, %p38
      %p40 = scmp.ne.s32.totalorder %s26, %s27
      %p41 = scmp.eq.s32.totalorder %s19, 1
      %p42 = por %p40, %p41
      %p44 = scmp.ne.s32.totalorder %s27, %s43
      %p45 = scmp.eq.s32.totalorder %s19, 0
      %p46 = por %p44, %p45
      %s48 = sadd.s32 %s47, 1
      %p51 = scmp.eq.s32.totalorder %s13, 1
      %p52 = scmp.ne.s32.totalorder %s47, %s49
      %p53 = scmp.eq.s32.totalorder %s13, 0
      %p54 = por %p52, %p53
      %p55 = scmp.ne.s32.totalorder %s47, %s49
      %p56 = scmp.eq.s32.totalorder %s18, 1
      %p57 = por %p55, %p56
      %p58 = scmp.ne.s32.totalorder %s49, %s50
      %p59 = scmp.eq.s32.totalorder %s18, 0
      %p60 = por %p58, %p59
      %p61 = scmp.ne.s32.totalorder %s49, %s50
      %p62 = scmp.eq.s32.totalorder %s19, 1
      %p63 = por %p61, %p62
      %p65 = scmp.ne.s32.totalorder %s50, %s64
      %p66 = scmp.eq.s32.totalorder %s19, 0
      %p67 = por %p65, %p66
      %s69 = sadd.s32 %s68, 1
      %p72 = scmp.eq.s32.totalorder %s13, 1
      %p73 = scmp.ne.s32.totalorder %s68, %s70
      %p74 = scmp.eq.s32.totalorder %s13, 0
      %p75 = por %p73, %p74
      %p76 = scmp.ne.s32.totalorder %s68, %s70
      %p77 = scmp.eq.s32.totalorder %s18, 1
      %p78 = por %p76, %p77
      %p79 = scmp.ne.s32.totalorder %s70, %s71
      %p80 = scmp.eq.s32.totalorder %s18, 0
      %p81 = por %p79, %p80
      %p82 = scmp.ne.s32.totalorder %s70, %s71
      %p83 = scmp.eq.s32.totalorder %s19, 1
      %p84 = por %p82, %p83
      %p86 = scmp.ne.s32.totalorder %s71, %s85
      %p87 = scmp.eq.s32.totalorder %s19, 0
      %p88 = por %p86, %p87
      %s90 = sadd.s32 %s89, 1
      %p93 = scmp.eq.s32.totalorder %s13, 1
      %p94 = scmp.ne.s32.totalorder %s89, %s91
      %p95 = scmp.eq.s32.totalorder %s13, 0
      %p96 = por %p94, %p95
      %p97 = scmp.ne.s32.totalorder %s89, %s91
      %p98 = scmp.eq.s32.totalorder %s18, 1
      %p99 = por %p97, %p98
      %p100 = scmp.ne.s32.totalorder %s91, %s92
      %p101 = scmp.eq.s32.totalorder %s18, 0
      %p102 = por %p100, %p101
      %p103 = scmp.ne.s32.totalorder %s91, %s92
      %p104 = scmp.eq.s32.totalorder %s19, 1
      %p105 = por %p103, %p104
      %p107 = scmp.ne.s32.totalorder %s92, %s106
      %p108 = scmp.eq.s32.totalorder %s19, 0
      %p109 = por %p107, %p108
      %s110 = ssub.s32 %s13, %s20
      %p111 = scmp.eq.s32.totalorder %s110, 0
      %s113 = sadd.s32 %s112, 1
      %s114 = scalar_select %p111, %s112, %s113
      %p117 = pneg %p111
      %p118 = scmp.eq.s32.totalorder %s13, 1
      %p119 = por %p117, %p118
      %p120 = scmp.ne.s32.totalorder %s112, %s115
      %p121 = scmp.eq.s32.totalorder %s13, 0
      %p122 = por %p120, %p121
      %p123 = scmp.ne.s32.totalorder %s112, %s115
      %p124 = scmp.eq.s32.totalorder %s18, 1
      %p125 = por %p123, %p124
      %p126 = scmp.ne.s32.totalorder %s115, %s116
      %p127 = scmp.eq.s32.totalorder %s18, 0
      %p128 = por %p126, %p127
      %p129 = scmp.ne.s32.totalorder %s115, %s116
      %p130 = scmp.eq.s32.totalorder %s19, 1
      %p131 = por %p129, %p130
      %p133 = scmp.ne.s32.totalorder %s116, %s132
      %p134 = scmp.eq.s32.totalorder %s19, 0
      %p135 = por %p133, %p134
      %p136 = scmp.le.s32.totalorder 1, %s13
      %p137 = scmp.lt.s32.totalorder %s13, 3
      %p138 = pnand %p136, %p137
      %p139 = pneg %p138
      // Predicated region
      $region9: #{depth_separable_conv2d.1} parent=5 // pred_check
        _
      $region10: #{depth_separable_conv2d.1} parent=5 // pred_check_branch
        %141 = sbr.rel (%p138) target = $region12
      $region11: #{depth_separable_conv2d.1} parent=5 // pred_region
        %s142 = ssub.s32 %s13, 1
        // Predicated region
        $region13: #{depth_separable_conv2d.1} parent=11 // pred_check
          %p143 = pneg %p60
        $region14: #{depth_separable_conv2d.1} parent=11 // pred_check_branch
          %145 = sbr.rel (%p143) target = $region16
        $region15: #{depth_separable_conv2d.1} parent=11 // pred_region
          _
        $region16: #{depth_separable_conv2d.1} parent=11 // pred_fallthru
          _
        // Predicated region
        $region17: #{depth_separable_conv2d.1} parent=11 // pred_check
          %p146 = pneg %p81
        $region18: #{depth_separable_conv2d.1} parent=11 // pred_check_branch
          %148 = sbr.rel (%p146) target = $region20
        $region19: #{depth_separable_conv2d.1} parent=11 // pred_region
          _
        $region20: #{depth_separable_conv2d.1} parent=11 // pred_fallthru
          _
        // Predicated region
        $region21: #{depth_separable_conv2d.1} parent=11 // pred_check
          %p149 = pneg %p102
        $region22: #{depth_separable_conv2d.1} parent=11 // pred_check_branch
          %151 = sbr.rel (%p149) target = $region24
        $region23: #{depth_separable_conv2d.1} parent=11 // pred_region
          _
        $region24: #{depth_separable_conv2d.1} parent=11 // pred_fallthru
          _
      $region12: #{depth_separable_conv2d.1} parent=5 // pred_fallthru
        _
      %p152 = scmp.lt.s32.totalorder %s13, 2
      // Predicated region
      $region25: #{depth_separable_conv2d.1} parent=5 // pred_check
        %p153 = pneg %p152
      $region26: #{depth_separable_conv2d.1} parent=5 // pred_check_branch
        %155 = sbr.rel (%p153) target = $region28
      $region27: #{depth_separable_conv2d.1} parent=5 // pred_region
        // Predicated region
        $region29: #{depth_separable_conv2d.1} parent=27 // pred_check
          %p156 = pneg %p33
        $region30: #{depth_separable_conv2d.1} parent=27 // pred_check_branch
          %158 = sbr.rel (%p156) target = $region32
        $region31: #{depth_separable_conv2d.1} parent=27 // pred_region
          %s159 = sand.u32 %s23, 1
          %s160 = scalar_lea.sflag [#allocation5], %s159
          %s161 = sand.u32 %s23, 1
          %s162 = smul.addr %s161, 64
          %s163 = scalar_lea.vmem [#allocation4], %s162
          %165 = vsyncadd %s160, 0
          %s166 = smul.addr %s13, 8
          %s167 = smul.addr %s166, 8
          %s168 = scalar_lea.hbm %s0, %s167
          %s169 = sshll.u32 %s168, 4
          %s170 = int_to_ptr.hbm [resolvable:$true] %s169
          %s171 = sshll.u32 %s163, 4
          %s172 = int_to_ptr.vmem [resolvable:$true] %s171
          %177 = dma.hbm_to_vmem [thread:$0]  %s170, 1024, %s172, %s160, 128, 128, 8
        $region32: #{depth_separable_conv2d.1} parent=27 // pred_fallthru
          _
      $region28: #{depth_separable_conv2d.1} parent=5 // pred_fallthru
        _
      %p178 = scmp.le.s32.totalorder 1, %s13
      %p179 = scmp.lt.s32.totalorder %s13, 3
      %p180 = pnand %p178, %p179
      %p181 = pneg %p180
      // Predicated region
      $region33: #{depth_separable_conv2d.1} parent=5 // pred_check
        _
      $region34: #{depth_separable_conv2d.1} parent=5 // pred_check_branch
        %183 = sbr.rel (%p180) target = $region36
      $region35: #{depth_separable_conv2d.1} parent=5 // pred_region
        %s184 = ssub.s32 %s13, 1
        %s185 = sand.u32 %s26, 1
        %s186 = scalar_lea.sflag [#allocation5], %s185
        %s187 = sand.u32 %s26, 1
        %s188 = smul.addr %s187, 64
        %s189 = scalar_lea.vmem [#allocation4], %s188
        // Predicated region
        $region37: #{depth_separable_conv2d.1} parent=35 // pred_check
          %p190 = pneg %p39
        $region38: #{depth_separable_conv2d.1} parent=35 // pred_check_branch
          %192 = sbr.rel (%p190) target = $region40
        $region39: #{depth_separable_conv2d.1} parent=35 // pred_region
          %194 = dma.done %s186, 1024
        $region40: #{depth_separable_conv2d.1} parent=35 // pred_fallthru
          _
        %s195 = sand.u32 %s26, 1
        %s196 = scalar_lea.sflag [#allocation5], %s195
        %s197 = sand.u32 %s26, 1
        %s198 = smul.addr %s197, 64
        %s199 = scalar_lea.vmem [#allocation4], %s198
        %p200 = pneg %p39
        %p201 = pneg %p36
        %p202 = pneg %p60
        %p203 = pneg %p57
        %p204 = pneg %p81
        %p205 = pneg %p78
        %p206 = pneg %p102
        %p207 = pneg %p99
        %p208 = pneg %p128
        %p209 = pneg %p125
        %p210 = scmp.lt.s32.totalorder %s18, 1
        %s211 = scalar_select %p210, %s18, 1
        %s212 = smul.addr %s211, 2
        %s213 = smul.addr %s212, 8
        %s214 = scalar_lea.vmem %s4, %s213
        %p215 = scmp.lt.s32.totalorder %s18, 1
        %s216 = scalar_select %p215, %s18, 1
        %s217 = smul.addr %s216, 2
        %s218 = smul.addr %s217, 8
        %s219 = scalar_lea.vmem %s4, %s218
        %220 = vst [vmem:[#allocation2] sm:$0xff] 0.0
        %vm221 = vcmask 699392
        %222 = vst.msk [vmem:[#allocation2 + $0x8] sm:$0xf] %vm221, 0.0
        %v223 = vld [vmem:[%s189] sm:$0x1]
        %v224 = vld [vmem:[%s189 + $0x10] sm:$0x1]
        %v225 = vld [vmem:[%s189 + $0x20] sm:$0x1]
        %v226 = vld [vmem:[%s189 + $0x30] sm:$0x1]
        %v231 = vrot.slane %v224, 7
        %vm232 = vcmask 1041409
        %v233 = vsel %vm232, %v231, %v223
        %vm234 = vcmask 1045509
        %v235 = vsel %vm234, %v231, %v233
        %v236 = vrot.slane %v225, 6
        %vm237 = vcmask 1042434
        %v238 = vsel %vm237, %v236, %v235
        %vm239 = vcmask 1046534
        %v240 = vsel %vm239, %v236, %v238
        %v241 = vrot.slane %v226, 5
        %vm242 = vcmask 1043459
        %v243 = vsel %vm242, %v241, %v240
        %vm244 = vcmask 1047559
        %v245 = vsel %vm244, %v241, %v243
        %246 = vrot.lane.b32.xlu0 %v245, 19
        %v247 = vpop.permute.xlu0 %246
        %vm249 = vcmask 281752
        %250 = vst.msk [vmem:[#allocation2] sm:$0xf] %vm249, %v247
        %v251 = vld [vmem:[%s189 + $0x1] sm:$0x1]
        %v252 = vld [vmem:[%s189 + $0x11] sm:$0x1]
        %v253 = vld [vmem:[%s189 + $0x21] sm:$0x1]
        %v254 = vld [vmem:[%s189 + $0x31] sm:$0x1]
        %v259 = vrot.slane %v252, 7
        %v260 = vsel %vm232, %v259, %v251
        %v261 = vsel %vm234, %v259, %v260
        %v262 = vrot.slane %v253, 6
        %v263 = vsel %vm237, %v262, %v261
        %v264 = vsel %vm239, %v262, %v263
        %v265 = vrot.slane %v254, 5
        %v266 = vsel %vm242, %v265, %v264
        %v267 = vsel %vm244, %v265, %v266
        %268 = vrot.lane.b32.xlu0 %v267, 37
        %v269 = vpop.permute.xlu0 %268
        %vm271 = vcmask 429352
        %272 = vst.msk [vmem:[#allocation2] sm:$0xf] %vm271, %v269
        %v273 = vld [vmem:[%s189 + $0x2] sm:$0x1]
        %v274 = vld [vmem:[%s189 + $0x12] sm:$0x1]
        %v275 = vld [vmem:[%s189 + $0x22] sm:$0x1]
        %v276 = vld [vmem:[%s189 + $0x32] sm:$0x1]
        %v281 = vrot.slane %v274, 7
        %v282 = vsel %vm232, %v281, %v273
        %v283 = vsel %vm234, %v281, %v282
        %v284 = vrot.slane %v275, 6
        %v285 = vsel %vm237, %v284, %v283
        %v286 = vsel %vm239, %v284, %v285
        %v287 = vrot.slane %v276, 5
        %v288 = vsel %vm242, %v287, %v286
        %v289 = vsel %vm244, %v287, %v288
        %290 = vrot.lane.b32.xlu0 %v289, 55
        %v291 = vpop.permute.xlu0 %290
        %vm293 = vcmask 576952
        %294 = vst.msk [vmem:[#allocation2] sm:$0xf] %vm293, %v291
        %v295 = vld [vmem:[%s189 + $0x3] sm:$0x1]
        %v296 = vld [vmem:[%s189 + $0x13] sm:$0x1]
        %v297 = vld [vmem:[%s189 + $0x23] sm:$0x1]
        %v298 = vld [vmem:[%s189 + $0x33] sm:$0x1]
        %v303 = vrot.slane %v296, 7
        %v304 = vsel %vm232, %v303, %v295
        %v305 = vsel %vm234, %v303, %v304
        %v306 = vrot.slane %v297, 6
        %v307 = vsel %vm237, %v306, %v305
        %v308 = vsel %vm239, %v306, %v307
        %v309 = vrot.slane %v298, 5
        %v310 = vsel %vm242, %v309, %v308
        %v311 = vsel %vm244, %v309, %v310
        %312 = vrot.lane.b32.xlu0 %v311, 73
        %v313 = vpop.permute.xlu0 %312
        %vm315 = vcmask 724552
        %316 = vst.msk [vmem:[#allocation2] sm:$0xf] %vm315, %v313
        %v317 = vld [vmem:[%s189 + $0x4] sm:$0x1]
        %v318 = vld [vmem:[%s189 + $0x14] sm:$0x1]
        %v319 = vld [vmem:[%s189 + $0x24] sm:$0x1]
        %v320 = vld [vmem:[%s189 + $0x34] sm:$0x1]
        %v325 = vrot.slane %v318, 7
        %v326 = vsel %vm232, %v325, %v317
        %v327 = vsel %vm234, %v325, %v326
        %v328 = vrot.slane %v319, 6
        %v329 = vsel %vm237, %v328, %v327
        %v330 = vsel %vm239, %v328, %v329
        %v331 = vrot.slane %v320, 5
        %v332 = vsel %vm242, %v331, %v330
        %v333 = vsel %vm244, %v331, %v332
        %334 = vrot.lane.b32.xlu0 %v333, 91
        %v335 = vpop.permute.xlu0 %334
        %vm337 = vcmask 872152
        %338 = vst.msk [vmem:[#allocation2] sm:$0xf] %vm337, %v335
        %v339 = vld [vmem:[%s189 + $0x5] sm:$0x1]
        %v340 = vld [vmem:[%s189 + $0x15] sm:$0x1]
        %v341 = vld [vmem:[%s189 + $0x25] sm:$0x1]
        %v342 = vld [vmem:[%s189 + $0x35] sm:$0x1]
        %v347 = vrot.slane %v340, 7
        %v348 = vsel %vm232, %v347, %v339
        %v349 = vsel %vm234, %v347, %v348
        %v350 = vrot.slane %v341, 6
        %v351 = vsel %vm237, %v350, %v349
        %v352 = vsel %vm239, %v350, %v351
        %v353 = vrot.slane %v342, 5
        %v354 = vsel %vm242, %v353, %v352
        %v355 = vsel %vm244, %v353, %v354
        %356 = vrot.lane.b32.xlu0 %v355, 109
        %v357 = vpop.permute.xlu0 %356
        %vm359 = vcmask 1019752
        %360 = vst.msk [vmem:[#allocation2] sm:$0xf] %vm359, %v357
        %v361 = vld [vmem:[%s189 + $0x6] sm:$0x1]
        %v362 = vld [vmem:[%s189 + $0x16] sm:$0x1]
        %v363 = vld [vmem:[%s189 + $0x26] sm:$0x1]
        %v364 = vld [vmem:[%s189 + $0x36] sm:$0x1]
        %v369 = vrot.slane %v362, 7
        %v370 = vsel %vm232, %v369, %v361
        %v371 = vsel %vm234, %v369, %v370
        %v372 = vrot.slane %v363, 6
        %v373 = vsel %vm237, %v372, %v371
        %v374 = vsel %vm239, %v372, %v373
        %v375 = vrot.slane %v364, 5
        %v376 = vsel %vm242, %v375, %v374
        %v377 = vsel %vm244, %v375, %v376
        %378 = vrot.lane.b32.xlu0 %v377, 127
        %v379 = vpop.permute.xlu0 %378
        %v380 = vrot.slane %v379, 4
        %vm381 = vcmask 1039360
        %v382 = vsel %vm381, %v380, %v379
        %vm384 = vcmask 1044472
        %vm385 = vcmask 121860
        %vm386 = vmor %vm385, %vm384
        %387 = vst.msk [vmem:[#allocation2] sm:$0xff] %vm386, %v382
        %v388 = vld [vmem:[%s189 + $0x7] sm:$0x1]
        %v389 = vld [vmem:[%s189 + $0x17] sm:$0x1]
        %v390 = vld [vmem:[%s189 + $0x27] sm:$0x1]
        %v391 = vld [vmem:[%s189 + $0x37] sm:$0x1]
        %v396 = vrot.slane %v389, 7
        %v397 = vsel %vm232, %v396, %v388
        %v398 = vsel %vm234, %v396, %v397
        %v399 = vrot.slane %v390, 6
        %v400 = vsel %vm237, %v399, %v398
        %v401 = vsel %vm239, %v399, %v400
        %v402 = vrot.slane %v391, 5
        %v403 = vsel %vm242, %v402, %v401
        %v404 = vsel %vm244, %v402, %v403
        %405 = vrot.lane.b32.xlu0 %v404, 17
        %v406 = vpop.permute.xlu0 %405
        %vm408 = vcmask 265352
        %409 = vst.msk [vmem:[#allocation2 + $0x4] sm:$0xf] %vm408, %v406
        %v410 = vld [vmem:[%s189 + $0x8] sm:$0x1]
        %v411 = vld [vmem:[%s189 + $0x18] sm:$0x1]
        %v412 = vld [vmem:[%s189 + $0x28] sm:$0x1]
        %v413 = vld [vmem:[%s189 + $0x38] sm:$0x1]
        %v418 = vrot.slane %v411, 7
        %v419 = vsel %vm232, %v418, %v410
        %v420 = vsel %vm234, %v418, %v419
        %v421 = vrot.slane %v412, 6
        %v422 = vsel %vm237, %v421, %v420
        %v423 = vsel %vm239, %v421, %v422
        %v424 = vrot.slane %v413, 5
        %v425 = vsel %vm242, %v424, %v423
        %v426 = vsel %vm244, %v424, %v425
        %427 = vrot.lane.b32.xlu0 %v426, 35
        %v428 = vpop.permute.xlu0 %427
        %vm430 = vcmask 412952
        %431 = vst.msk [vmem:[#allocation2 + $0x4] sm:$0xf] %vm430, %v428
        %v432 = vld [vmem:[%s189 + $0x9] sm:$0x1]
        %v433 = vld [vmem:[%s189 + $0x19] sm:$0x1]
        %v434 = vld [vmem:[%s189 + $0x29] sm:$0x1]
        %v435 = vld [vmem:[%s189 + $0x39] sm:$0x1]
        %v440 = vrot.slane %v433, 7
        %v441 = vsel %vm232, %v440, %v432
        %v442 = vsel %vm234, %v440, %v441
        %v443 = vrot.slane %v434, 6
        %v444 = vsel %vm237, %v443, %v442
        %v445 = vsel %vm239, %v443, %v444
        %v446 = vrot.slane %v435, 5
        %v447 = vsel %vm242, %v446, %v445
        %v448 = vsel %vm244, %v446, %v447
        %449 = vrot.lane.b32.xlu0 %v448, 53
        %v450 = vpop.permute.xlu0 %449
        %vm452 = vcmask 560552
        %453 = vst.msk [vmem:[#allocation2 + $0x4] sm:$0xf] %vm452, %v450
        %v454 = vld [vmem:[%s189 + $0xa] sm:$0x1]
        %v455 = vld [vmem:[%s189 + $0x1a] sm:$0x1]
        %v456 = vld [vmem:[%s189 + $0x2a] sm:$0x1]
        %v457 = vld [vmem:[%s189 + $0x3a] sm:$0x1]
        %v462 = vrot.slane %v455, 7
        %v463 = vsel %vm232, %v462, %v454
        %v464 = vsel %vm234, %v462, %v463
        %v465 = vrot.slane %v456, 6
        %v466 = vsel %vm237, %v465, %v464
        %v467 = vsel %vm239, %v465, %v466
        %v468 = vrot.slane %v457, 5
        %v469 = vsel %vm242, %v468, %v467
        %v470 = vsel %vm244, %v468, %v469
        %471 = vrot.lane.b32.xlu0 %v470, 71
        %v472 = vpop.permute.xlu0 %471
        %vm474 = vcmask 708152
        %475 = vst.msk [vmem:[#allocation2 + $0x4] sm:$0xf] %vm474, %v472
        %v476 = vld [vmem:[%s189 + $0xb] sm:$0x1]
        %v477 = vld [vmem:[%s189 + $0x1b] sm:$0x1]
        %v478 = vld [vmem:[%s189 + $0x2b] sm:$0x1]
        %v479 = vld [vmem:[%s189 + $0x3b] sm:$0x1]
        %v484 = vrot.slane %v477, 7
        %v485 = vsel %vm232, %v484, %v476
        %v486 = vsel %vm234, %v484, %v485
        %v487 = vrot.slane %v478, 6
        %v488 = vsel %vm237, %v487, %v486
        %v489 = vsel %vm239, %v487, %v488
        %v490 = vrot.slane %v479, 5
        %v491 = vsel %vm242, %v490, %v489
        %v492 = vsel %vm244, %v490, %v491
        %493 = vrot.lane.b32.xlu0 %v492, 89
        %v494 = vpop.permute.xlu0 %493
        %vm496 = vcmask 855752
        %497 = vst.msk [vmem:[#allocation2 + $0x4] sm:$0xf] %vm496, %v494
        %v498 = vld [vmem:[%s189 + $0xc] sm:$0x1]
        %v499 = vld [vmem:[%s189 + $0x1c] sm:$0x1]
        %v500 = vld [vmem:[%s189 + $0x2c] sm:$0x1]
        %v501 = vld [vmem:[%s189 + $0x3c] sm:$0x1]
        %v506 = vrot.slane %v499, 7
        %v507 = vsel %vm232, %v506, %v498
        %v508 = vsel %vm234, %v506, %v507
        %v509 = vrot.slane %v500, 6
        %v510 = vsel %vm237, %v509, %v508
        %v511 = vsel %vm239, %v509, %v510
        %v512 = vrot.slane %v501, 5
        %v513 = vsel %vm242, %v512, %v511
        %v514 = vsel %vm244, %v512, %v513
        %515 = vrot.lane.b32.xlu0 %v514, 107
        %v516 = vpop.permute.xlu0 %515
        %vm518 = vcmask 1003352
        %519 = vst.msk [vmem:[#allocation2 + $0x4] sm:$0xf] %vm518, %v516
        %v520 = vld [vmem:[%s189 + $0xd] sm:$0x1]
        %v521 = vld [vmem:[%s189 + $0x1d] sm:$0x1]
        %v522 = vld [vmem:[%s189 + $0x2d] sm:$0x1]
        %v523 = vld [vmem:[%s189 + $0x3d] sm:$0x1]
        %v528 = vrot.slane %v521, 7
        %v529 = vsel %vm232, %v528, %v520
        %v530 = vsel %vm234, %v528, %v529
        %v531 = vrot.slane %v522, 6
        %v532 = vsel %vm237, %v531, %v530
        %v533 = vsel %vm239, %v531, %v532
        %v534 = vrot.slane %v523, 5
        %v535 = vsel %vm242, %v534, %v533
        %v536 = vsel %vm244, %v534, %v535
        %537 = vrot.lane.b32.xlu0 %v536, 125
        %v538 = vpop.permute.xlu0 %537
        %v539 = vrot.slane %v538, 4
        %vm540 = vcmask 1022976
        %v541 = vsel %vm540, %v539, %v538
        %vm543 = vcmask 1044456
        %vm544 = vcmask 105476
        %vm545 = vmor %vm544, %vm543
        %546 = vst.msk [vmem:[#allocation2 + $0x4] sm:$0xff] %vm545, %v541
        %v547 = vld [vmem:[%s189 + $0xe] sm:$0x1]
        %v548 = vld [vmem:[%s189 + $0x1e] sm:$0x1]
        %v549 = vld [vmem:[%s189 + $0x2e] sm:$0x1]
        %v550 = vld [vmem:[%s189 + $0x3e] sm:$0x1]
        %v555 = vrot.slane %v548, 7
        %v556 = vsel %vm232, %v555, %v547
        %v557 = vsel %vm234, %v555, %v556
        %v558 = vrot.slane %v549, 6
        %v559 = vsel %vm237, %v558, %v557
        %v560 = vsel %vm239, %v558, %v559
        %v561 = vrot.slane %v550, 5
        %v562 = vsel %vm242, %v561, %v560
        %v563 = vsel %vm244, %v561, %v562
        %564 = vrot.lane.b32.xlu0 %v563, 15
        %v565 = vpop.permute.xlu0 %564
        %vm567 = vcmask 248952
        %568 = vst.msk [vmem:[#allocation2 + $0x8] sm:$0xf] %vm567, %v565
        %v569 = vld [vmem:[%s189 + $0xf] sm:$0x1]
        %v570 = vld [vmem:[%s189 + $0x1f] sm:$0x1]
        %v571 = vld [vmem:[%s189 + $0x2f] sm:$0x1]
        %v572 = vld [vmem:[%s189 + $0x3f] sm:$0x1]
        %v577 = vrot.slane %v570, 7
        %v578 = vsel %vm232, %v577, %v569
        %v579 = vsel %vm234, %v577, %v578
        %v580 = vrot.slane %v571, 6
        %v581 = vsel %vm237, %v580, %v579
        %v582 = vsel %vm239, %v580, %v581
        %v583 = vrot.slane %v572, 5
        %v584 = vsel %vm242, %v583, %v582
        %v585 = vsel %vm244, %v583, %v584
        %586 = vrot.lane.b32.xlu0 %v585, 33
        %v587 = vpop.permute.xlu0 %586
        %vm589 = vcmask 396552
        %590 = vst.msk [vmem:[#allocation2 + $0x8] sm:$0xf] %vm589, %v587
        %v591 = vld [vmem:[#allocation2] sm:$0xff]
        %v592 = vld [vmem:[#allocation2 + $0x8] sm:$0xf]
        %v593 = vld [vmem:[%s1] sm:$0xf]
        %v594 = vld [vmem:[%s2] sm:$0xff]
        %v595 = vld [vmem:[%s3] sm:$0xff]
        %597 = vset.pattern.permute.xlu0 0
        %598 = vperm.xlu0 %597, %v593
        %v599 = vpop.permute.xlu0 %598
        %v601 = vunpack.c.l.s4 839922192
        %v602 = vunpack.c.0.s8 %v601
        %v603 = vperm.slane %v599, %v602
        %v605 = vmul.f32 %v591, %v603
        %v606 = vmul.f32 %v592, %v603
        %v607 = vadd.f32 %v605, 0.0
        %v608 = vadd.f32 %v606, 0.0
        %609 = vset.pattern.permute.xlu0 1
        %610 = vperm.xlu0 %609, %v593
        %v611 = vpop.permute.xlu0 %610
        %v613 = vunpack.c.l.s4 839922192
        %v614 = vunpack.c.0.s8 %v613
        %v615 = vperm.slane %v611, %v614
        %v617 = vmul.f32 %v591, %v615
        %v618 = vmul.f32 %v592, %v615
        %621 = vrot.lane.b32.xlu0 %v617, 127
        %v622 = vpop.permute.xlu0 %621
        %623 = vrot.lane.b32.xlu0 %v618, 127
        %v624 = vpop.permute.xlu0 %623
        %v625 = vrot.slane %v622, 4
        %v626 = vrot.slane %v624, 4
        %vm627 = vcmask 1043456
        %v628 = vsel %vm627, %v625, %v626
        %v629 = vsel %vm381, %v622, %v628
        %v632 = vadd.f32 %v607, %v629
        %v633 = vadd.f32 %v608, %v624
        %634 = vset.pattern.permute.xlu0 2
        %635 = vperm.xlu0 %634, %v593
        %v636 = vpop.permute.xlu0 %635
        %v638 = vunpack.c.l.s4 839922192
        %v639 = vunpack.c.0.s8 %v638
        %v640 = vperm.slane %v636, %v639
        %v642 = vmul.f32 %v591, %v640
        %v643 = vmul.f32 %v592, %v640
        %646 = vrot.lane.b32.xlu0 %v642, 126
        %v647 = vpop.permute.xlu0 %646
        %648 = vrot.lane.b32.xlu0 %v643, 126
        %v649 = vpop.permute.xlu0 %648
        %v650 = vrot.slane %v647, 4
        %v651 = vrot.slane %v649, 4
        %v652 = vsel %vm627, %v650, %v651
        %vm653 = vcmask 1031168
        %v654 = vsel %vm653, %v647, %v652
        %v657 = vadd.f32 %v632, %v654
        %v658 = vadd.f32 %v633, %v649
        %659 = vset.pattern.permute.xlu0 3
        %660 = vperm.xlu0 %659, %v593
        %v661 = vpop.permute.xlu0 %660
        %v663 = vunpack.c.l.s4 839922192
        %v664 = vunpack.c.0.s8 %v663
        %v665 = vperm.slane %v661, %v664
        %v667 = vmul.f32 %v591, %v665
        %v668 = vmul.f32 %v592, %v665
        %671 = vrot.lane.b32.xlu0 %v667, 110
        %v672 = vpop.permute.xlu0 %671
        %673 = vrot.lane.b32.xlu0 %v668, 110
        %v674 = vpop.permute.xlu0 %673
        %v675 = vrot.slane %v672, 4
        %v676 = vrot.slane %v674, 4
        %v677 = vsel %vm627, %v675, %v676
        %vm678 = vcmask 900096
        %v679 = vsel %vm678, %v672, %v677
        %v682 = vadd.f32 %v657, %v679
        %v683 = vadd.f32 %v658, %v674
        %684 = vset.pattern.permute.xlu0 4
        %685 = vperm.xlu0 %684, %v593
        %v686 = vpop.permute.xlu0 %685
        %v688 = vunpack.c.l.s4 839922192
        %v689 = vunpack.c.0.s8 %v688
        %v690 = vperm.slane %v686, %v689
        %v692 = vmul.f32 %v591, %v690
        %v693 = vmul.f32 %v592, %v690
        %696 = vrot.lane.b32.xlu0 %v692, 109
        %v697 = vpop.permute.xlu0 %696
        %698 = vrot.lane.b32.xlu0 %v693, 109
        %v699 = vpop.permute.xlu0 %698
        %v700 = vrot.slane %v697, 4
        %v701 = vrot.slane %v699, 4
        %v702 = vsel %vm627, %v700, %v701
        %vm703 = vcmask 891904
        %v704 = vsel %vm703, %v697, %v702
        %v707 = vadd.f32 %v682, %v704
        %v708 = vadd.f32 %v683, %v699
        %709 = vset.pattern.permute.xlu0 5
        %710 = vperm.xlu0 %709, %v593
        %v711 = vpop.permute.xlu0 %710
        %v713 = vunpack.c.l.s4 839922192
        %v714 = vunpack.c.0.s8 %v713
        %v715 = vperm.slane %v711, %v714
        %v717 = vmul.f32 %v591, %v715
        %v718 = vmul.f32 %v592, %v715
        %721 = vrot.lane.b32.xlu0 %v717, 108
        %v722 = vpop.permute.xlu0 %721
        %723 = vrot.lane.b32.xlu0 %v718, 108
        %v724 = vpop.permute.xlu0 %723
        %v725 = vrot.slane %v722, 4
        %v726 = vrot.slane %v724, 4
        %v727 = vsel %vm627, %v725, %v726
        %vm728 = vcmask 883712
        %v729 = vsel %vm728, %v722, %v727
        %v732 = vadd.f32 %v707, %v729
        %v733 = vadd.f32 %v708, %v724
        %734 = vset.pattern.permute.xlu0 6
        %735 = vperm.xlu0 %734, %v593
        %v736 = vpop.permute.xlu0 %735
        %v738 = vunpack.c.l.s4 839922192
        %v739 = vunpack.c.0.s8 %v738
        %v740 = vperm.slane %v736, %v739
        %v742 = vmul.f32 %v591, %v740
        %v743 = vmul.f32 %v592, %v740
        %746 = vrot.lane.b32.xlu0 %v742, 92
        %v747 = vpop.permute.xlu0 %746
        %748 = vrot.lane.b32.xlu0 %v743, 92
        %v749 = vpop.permute.xlu0 %748
        %v750 = vrot.slane %v747, 4
        %v751 = vrot.slane %v749, 4
        %v752 = vsel %vm627, %v750, %v751
        %vm753 = vcmask 752640
        %v754 = vsel %vm753, %v747, %v752
        %v757 = vadd.f32 %v732, %v754
        %v758 = vadd.f32 %v733, %v749
        %759 = vset.pattern.permute.xlu0 7
        %760 = vperm.xlu0 %759, %v593
        %v761 = vpop.permute.xlu0 %760
        %v763 = vunpack.c.l.s4 839922192
        %v764 = vunpack.c.0.s8 %v763
        %v765 = vperm.slane %v761, %v764
        %v767 = vmul.f32 %v591, %v765
        %v768 = vmul.f32 %v592, %v765
        %771 = vrot.lane.b32.xlu0 %v767, 91
        %v772 = vpop.permute.xlu0 %771
        %773 = vrot.lane.b32.xlu0 %v768, 91
        %v774 = vpop.permute.xlu0 %773
        %v775 = vrot.slane %v772, 4
        %v776 = vrot.slane %v774, 4
        %v777 = vsel %vm627, %v775, %v776
        %vm778 = vcmask 744448
        %v779 = vsel %vm778, %v772, %v777
        %v782 = vadd.f32 %v757, %v779
        %v783 = vadd.f32 %v758, %v774
        %784 = vset.pattern.permute.xlu0 8
        %785 = vperm.xlu0 %784, %v593
        %v786 = vpop.permute.xlu0 %785
        %v788 = vunpack.c.l.s4 839922192
        %v789 = vunpack.c.0.s8 %v788
        %v790 = vperm.slane %v786, %v789
        %v792 = vmul.f32 %v591, %v790
        %v793 = vmul.f32 %v592, %v790
        %796 = vrot.lane.b32.xlu0 %v792, 90
        %v797 = vpop.permute.xlu0 %796
        %798 = vrot.lane.b32.xlu0 %v793, 90
        %v799 = vpop.permute.xlu0 %798
        %v800 = vrot.slane %v797, 4
        %v801 = vrot.slane %v799, 4
        %v802 = vsel %vm627, %v800, %v801
        %vm803 = vcmask 736256
        %v804 = vsel %vm803, %v797, %v802
        %v807 = vadd.f32 %v782, %v804
        %v808 = vadd.f32 %v783, %v799
        %vm809 = vcmask 125952
        %810 = vst.msk [vmem:[#allocation3] sm:$0xf] %vm809, %v807
        %812 = vrot.lane.b32.xlu0 %v807, 126
        %v813 = vpop.permute.xlu0 %812
        %vm815 = vcmask 257152
        %816 = vst.msk [vmem:[#allocation3] sm:$0xf] %vm815, %v813
        %817 = vrot.lane.b32.xlu0 %v807, 124
        %v818 = vpop.permute.xlu0 %817
        %vm820 = vcmask 388352
        %821 = vst.msk [vmem:[#allocation3] sm:$0xf] %vm820, %v818
        %822 = vrot.lane.b32.xlu0 %v807, 122
        %v823 = vpop.permute.xlu0 %822
        %vm825 = vcmask 519552
        %826 = vst.msk [vmem:[#allocation3] sm:$0xf] %vm825, %v823
        %827 = vrot.lane.b32.xlu0 %v807, 120
        %v828 = vpop.permute.xlu0 %827
        %vm830 = vcmask 650752
        %831 = vst.msk [vmem:[#allocation3] sm:$0xf] %vm830, %v828
        %832 = vrot.lane.b32.xlu0 %v807, 118
        %v833 = vpop.permute.xlu0 %832
        %vm835 = vcmask 781952
        %836 = vst.msk [vmem:[#allocation3] sm:$0xf] %vm835, %v833
        %837 = vrot.lane.b32.xlu0 %v807, 116
        %v838 = vpop.permute.xlu0 %837
        %vm840 = vcmask 913152
        %841 = vst.msk [vmem:[#allocation3] sm:$0xf] %vm840, %v838
        %842 = vrot.lane.b32.xlu0 %v807, 114
        %v843 = vpop.permute.xlu0 %842
        %v844 = vrot.slane %v843, 4
        %vm845 = vcmask 932864
        %v846 = vsel %vm845, %v843, %v844
        %vm848 = vcmask 1044352
        %849 = vst.msk [vmem:[#allocation3] sm:$0xf] %vm848, %v846
        %850 = vrot.lane.b32.xlu0 %v807, 112
        %v851 = vpop.permute.xlu0 %850
        %v852 = vrot.slane %v851, 4
        %854 = vst.msk [vmem:[#allocation3 + $0x4] sm:$0xf] %vm809, %v852
        %855 = vrot.lane.b32.xlu0 %v807, 110
        %v856 = vpop.permute.xlu0 %855
        %v857 = vrot.slane %v856, 4
        %859 = vst.msk [vmem:[#allocation3 + $0x4] sm:$0xf] %vm815, %v857
        %860 = vrot.lane.b32.xlu0 %v807, 108
        %v861 = vpop.permute.xlu0 %860
        %v862 = vrot.slane %v861, 4
        %864 = vst.msk [vmem:[#allocation3 + $0x4] sm:$0xf] %vm820, %v862
        %865 = vrot.lane.b32.xlu0 %v807, 106
        %v866 = vpop.permute.xlu0 %865
        %v867 = vrot.slane %v866, 4
        %869 = vst.msk [vmem:[#allocation3 + $0x4] sm:$0xf] %vm825, %v867
        %870 = vrot.lane.b32.xlu0 %v807, 104
        %v871 = vpop.permute.xlu0 %870
        %v872 = vrot.slane %v871, 4
        %874 = vst.msk [vmem:[#allocation3 + $0x4] sm:$0xf] %vm830, %v872
        %875 = vrot.lane.b32.xlu0 %v807, 102
        %v876 = vpop.permute.xlu0 %875
        %v877 = vrot.slane %v876, 4
        %879 = vst.msk [vmem:[#allocation3 + $0x4] sm:$0xf] %vm835, %v877
        %881 = vrot.lane.b32.xlu0 %v807, 100
        %v882 = vpop.permute.xlu0 %881
        %883 = vrot.lane.b32.xlu0 %v808, 100
        %v884 = vpop.permute.xlu0 %883
        %v885 = vrot.slane %v882, 4
        %vm886 = vcmask 818176
        %v887 = vsel %vm886, %v885, %v884
        %889 = vst.msk [vmem:[#allocation3 + $0x4] sm:$0xf] %vm840, %v887
        %890 = vrot.lane.b32.xlu0 %v808, 98
        %v891 = vpop.permute.xlu0 %890
        %893 = vst.msk [vmem:[#allocation3 + $0x4] sm:$0xf] %vm848, %v891
        %v894 = vld [vmem:[#allocation3] sm:$0xff]
        %896 = vset.pattern.permute.xlu0 0
        %897 = vperm.xlu0 %896, %v594
        %v898 = vpop.permute.xlu0 %897
        %v901 = vperm.slane %v894, 0
        %v902 = vperm.slane %v894, 4
        %v905 = vperm.slane %v901, 0
        %v906 = vperm.slane %v902, 0
        %v907 = vmul.f32 %v898, %v905
        %v908 = vmul.f32 %v898, %v906
        %909 = vset.pattern.permute.xlu0 1
        %910 = vperm.xlu0 %909, %v594
        %v911 = vpop.permute.xlu0 %910
        %v913 = vperm.slane %v894, 1
        %v914 = vperm.slane %v894, 5
        %v917 = vperm.slane %v913, 1
        %v918 = vperm.slane %v914, 1
        %v919 = vmul.f32 %v911, %v917
        %v920 = vmul.f32 %v911, %v918
        %v921 = vadd.f32 %v907, %v919
        %v922 = vadd.f32 %v908, %v920
        %923 = vset.pattern.permute.xlu0 2
        %924 = vperm.xlu0 %923, %v594
        %v925 = vpop.permute.xlu0 %924
        %v927 = vperm.slane %v894, 2
        %v928 = vperm.slane %v894, 6
        %v931 = vperm.slane %v927, 2
        %v932 = vperm.slane %v928, 2
        %v933 = vmul.f32 %v925, %v931
        %v934 = vmul.f32 %v925, %v932
        %v935 = vadd.f32 %v921, %v933
        %v936 = vadd.f32 %v922, %v934
        %937 = vset.pattern.permute.xlu0 3
        %938 = vperm.xlu0 %937, %v594
        %v939 = vpop.permute.xlu0 %938
        %v941 = vperm.slane %v894, 3
        %v942 = vperm.slane %v894, 7
        %v945 = vperm.slane %v941, 3
        %v946 = vperm.slane %v942, 3
        %v947 = vmul.f32 %v939, %v945
        %v948 = vmul.f32 %v939, %v946
        %v949 = vadd.f32 %v935, %v947
        %v950 = vadd.f32 %v936, %v948
        %952 = vset.pattern.permute.xlu0 0
        %953 = vperm.xlu0 %952, %v595
        %v954 = vpop.permute.xlu0 %953
        %v956 = vadd.f32 %v949, %v954
        %v957 = vadd.f32 %v950, %v954
        %958 = vst [vmem:[%s219] sm:$0xff] %v956
        %959 = vst [vmem:[%s219 + $0x8] sm:$0xff] %v957
        %p960 = scmp.lt.s32.totalorder %s18, 1
        %s961 = scalar_select %p960, %s18, 1
        %s962 = smul.addr %s961, 2
        %s963 = smul.addr %s962, 8
        %s964 = scalar_lea.vmem %s4, %s963
        // Predicated region
        $region41: #{depth_separable_conv2d.1} parent=35 // pred_check
          %p965 = pneg %p125
        $region42: #{depth_separable_conv2d.1} parent=35 // pred_check_branch
          %967 = sbr.rel (%p965) target = $region44
        $region43: #{depth_separable_conv2d.1} parent=35 // pred_region
          _
        $region44: #{depth_separable_conv2d.1} parent=35 // pred_fallthru
          _
      $region36: #{depth_separable_conv2d.1} parent=5 // pred_fallthru
        _
      %p968 = scmp.le.s32.totalorder 2, %s13
      // Predicated region
      $region45: #{depth_separable_conv2d.1} parent=5 // pred_check
        %p969 = pneg %p968
      $region46: #{depth_separable_conv2d.1} parent=5 // pred_check_branch
        %971 = sbr.rel (%p969) target = $region48
      $region47: #{depth_separable_conv2d.1} parent=5 // pred_region
        %s972 = ssub.s32 %s13, 2
        // Predicated region
        $region49: #{depth_separable_conv2d.1} parent=47 // pred_check
          %p973 = pneg %p131
        $region50: #{depth_separable_conv2d.1} parent=47 // pred_check_branch
          %975 = sbr.rel (%p973) target = $region52
        $region51: #{depth_separable_conv2d.1} parent=47 // pred_region
          %p976 = scmp.lt.s32.totalorder %s19, 1
          %s977 = scalar_select %p976, %s19, 1
          %s978 = smul.addr %s977, 2
          %s979 = smul.addr %s978, 8
          %s980 = scalar_lea.vmem %s4, %s979
        $region52: #{depth_separable_conv2d.1} parent=47 // pred_fallthru
          _
      $region48: #{depth_separable_conv2d.1} parent=5 // pred_fallthru
        _
    $region6: #{depth_separable_conv2d.1} parent=1 // loop_footer
      %s17 = sadd.s32 1, %s13
    $region7: #{depth_separable_conv2d.1} parent=1 // loop_footer_branch
      %12 = sbr.rel target = $region3
    $region8: #{depth_separable_conv2d.1} parent=1 // loop_exit
      _
    %981 = vsyncpa [#allocation5], 1
    %s982 = scalar_lea.sflag [#allocation5], 1
    %983 = vsyncpa %s982, 1

</llo_original>
